<compile_context>
chip_gen: v7x
topology: tpu7x:2x2x1
jax: 0.10.0
libtpu: 0.0.40
codegen_flags: <defaults>
</compile_context>

<pallas_src>
import jax
import jax.numpy as jnp
from jax.experimental import pallas as pl
from jax.experimental.pallas import tpu as pltpu


def _chain_bmm_kernel(x1_ref, x2_ref, out_ref):
    # Block shapes: x1/x2 -> (Bt, M, N), out -> (Bt, N, N) with M == N.
    x1 = x1_ref[...]
    x2 = x2_ref[...]
    dt = x1.dtype

    # y1 = x1^T @ x2 : contract over the shared leading matrix axis (M).
    y1 = jnp.einsum(
        "bmi,bmj->bij", x1, x2, preferred_element_type=jnp.float32
    ).astype(dt)
    # y2 = x2^T @ y1 : same transposed-LHS contraction.
    y2 = jnp.einsum(
        "bmi,bmj->bij", x2, y1, preferred_element_type=jnp.float32
    ).astype(dt)
    # x3 = y2 @ y2 : plain batched NN matmul.
    y3 = jnp.einsum(
        "bik,bkj->bij", y2, y2, preferred_element_type=jnp.float32
    )
    out_ref[...] = y3.astype(out_ref.dtype)


def _padded_tile_bytes(rows, cols, itemsize):
    """Bytes one (rows, cols) slab really occupies in VMEM after (sublane,128)
    tile padding.  Sublane tile is 32/itemsize (8 for f32, 16 for bf16)."""
    sub = max(8, 32 // itemsize)
    r = ((rows + sub - 1) // sub) * sub
    c = ((cols + 127) // 128) * 128
    return r * c * itemsize


def chain_bmm(x1, x2, *, block_b=None):
    """x1, x2: (B, M, N) with M == N  ->  x3: (B, N, N) in the promoted dtype."""
    B, M, N = x1.shape
    assert x2.shape == (B, M, N)
    assert M == N, "the bmm chain in the torch module requires square matrices"

    out_dtype = jnp.result_type(x1.dtype, x2.dtype)
    if x1.dtype != out_dtype:
        x1 = x1.astype(out_dtype)
    if x2.dtype != out_dtype:
        x2 = x2.astype(out_dtype)
    itemsize = jnp.dtype(out_dtype).itemsize

    # Tile-padding-corrected per-batch VMEM footprints.
    in_tile = _padded_tile_bytes(M, N, itemsize)   # one input matrix
    io_tile = _padded_tile_bytes(N, N, itemsize)   # one output matrix
    f32_tile = _padded_tile_bytes(N, N, 4)         # one f32 intermediate

    # ---- Tiny problems: single no-grid invocation (no pipelining machinery).
    single_total = B * (2 * in_tile + io_tile + 3 * f32_tile)
    if block_b is None and single_total <= 2 * 1024 * 1024:
        vmem_limit = int(min(32 * 1024 * 1024,
                             max(4 * 1024 * 1024, 2 * single_total)))
        return pl.pallas_call(
            _chain_bmm_kernel,
            out_shape=jax.ShapeDtypeStruct((B, N, N), out_dtype),
            compiler_params=pltpu.CompilerParams(
                vmem_limit_bytes=vmem_limit),
        )(x1, x2)

    # ---- Grid over batch blocks (double-buffered by the Pallas pipeline).
    per_batch = (
        2 * 2 * in_tile    # two inputs, double-buffered
        + 2 * io_tile      # output, double-buffered
        + 3 * f32_tile     # y1 / y2 / y3 f32 intermediates
    )
    budget = 20 * 1024 * 1024
    if block_b is None:
        cap = max(1, min(256, budget // per_batch))
        # Keep at least 2 grid steps so v7x's second TensorCore does work.
        block_b = max(1, min(cap, pl.cdiv(B, 2)))
    block_b = int(max(1, min(block_b, B)))
    num_blocks = pl.cdiv(B, block_b)

    needed = block_b * per_batch
    vmem_limit = int(min(32 * 1024 * 1024,
                         max(4 * 1024 * 1024, needed * 3 // 2)))

    in_spec = pl.BlockSpec((block_b, M, N), lambda i: (i, 0, 0))
    out_spec = pl.BlockSpec((block_b, N, N), lambda i: (i, 0, 0))

    return pl.pallas_call(
        _chain_bmm_kernel,
        out_shape=jax.ShapeDtypeStruct((B, N, N), out_dtype),
        grid=(num_blocks,),
        in_specs=[in_spec, in_spec],
        out_specs=out_spec,
        compiler_params=pltpu.CompilerParams(
            dimension_semantics=("parallel",),
            vmem_limit_bytes=vmem_limit,
        ),
    )(x1, x2)


def reference(x1, x2):
    a = jnp.swapaxes(x1, 1, 2)
    b = jnp.swapaxes(x2, 1, 2)
    y1 = jnp.einsum("bij,bjk->bik", a, x2)
    y2 = jnp.einsum("bij,bjk->bik", b, y1)
    y3 = jnp.einsum("bij,bjk->bik", y2, y2)
    return y3


if __name__ == "__main__":
    key = jax.random.PRNGKey(0)
    k1, k2 = jax.random.split(key)
    # Same axis convention as the torch module (which uses (1, 2, 2));
    # slightly larger square batched matrices here.
    B, M, N = 4, 16, 16
    x1 = jax.random.normal(k1, (B, M, N), dtype=jnp.float32)
    x2 = jax.random.normal(k2, (B, M, N), dtype=jnp.float32)

    out = chain_bmm(x1, x2)
    jax.block_until_ready(out)

    ref = reference(x1, x2)
    assert out.shape == (B, N, N)
    assert out.dtype == x1.dtype
    assert jnp.allclose(out, ref, atol=1e-3, rtol=1e-3), "mismatch vs reference"

    # Also exercise the gridded path (larger, non-divisible batch) once.
    B2 = 37
    xa = jax.random.normal(k1, (B2, M, N), dtype=jnp.float32)
    xb = jax.random.normal(k2, (B2, M, N), dtype=jnp.float32)
    out2 = chain_bmm(xa, xb, block_b=16)
    jax.block_until_ready(out2)
    assert jnp.allclose(out2, reference(xa, xb), atol=1e-3, rtol=1e-3), \
        "mismatch vs reference (gridded path)"

    print("KERNEL_OK")
</pallas_src>

<mosaic_0001>
module attributes {stable_mosaic.version = 11 : i64} {
  func.func @_chain_bmm_kernel(%arg0: memref<4x16x16xf32, #tpu.memory_space<vmem>>, %arg1: memref<4x16x16xf32, #tpu.memory_space<vmem>>, %arg2: memref<4x16x16xf32, #tpu.memory_space<vmem>>) attributes {dimension_semantics = [], scalar_prefetch = 0 : i64, scratch_operands = 0 : i64, tpu.core_type = #tpu.core_type<tc>} {
    %c0 = arith.constant 0 : index
    %c0_0 = arith.constant 0 : index
    %c0_1 = arith.constant 0 : index
    %0 = vector.load %arg0[%c0, %c0_0, %c0_1] : memref<4x16x16xf32, #tpu.memory_space<vmem>>, vector<4x16x16xf32>
    %c0_2 = arith.constant 0 : index
    %c0_3 = arith.constant 0 : index
    %c0_4 = arith.constant 0 : index
    %1 = vector.load %arg1[%c0_2, %c0_3, %c0_4] : memref<4x16x16xf32, #tpu.memory_space<vmem>>, vector<4x16x16xf32>
    "tpu.trace_start"() <{level = 10 : i32, message = "bmi,bmj->bij"}> : () -> ()
    %cst = arith.constant dense<0.000000e+00> : vector<4x16x16xf32>
    %2 = tpu.matmul %0, %1, %cst {dimension_numbers = #tpu.dot_dimension_numbers<[1], [1], [2], [2], [0, 0, 0, 2, 1, 2], [0], [0]>} : vector<4x16x16xf32>, vector<4x16x16xf32>, vector<4x16x16xf32> -> vector<4x16x16xf32>
    %cst_5 = arith.constant dense<0.000000e+00> : vector<4x16x16xf32>
    %3 = tpu.matmul %1, %2, %cst_5 {dimension_numbers = #tpu.dot_dimension_numbers<[1], [1], [2], [2], [0, 0, 0, 2, 1, 2], [0], [0]>} : vector<4x16x16xf32>, vector<4x16x16xf32>, vector<4x16x16xf32> -> vector<4x16x16xf32>
    "tpu.trace_stop"() : () -> ()
    "tpu.trace_start"() <{level = 10 : i32, message = "bik,bkj->bij"}> : () -> ()
    %cst_6 = arith.constant dense<0.000000e+00> : vector<4x16x16xf32>
    %4 = tpu.matmul %3, %3, %cst_6 {dimension_numbers = #tpu.dot_dimension_numbers<[2], [1], [1], [2], [0, 0, 0, 1, 1, 2], [0], [0]>} : vector<4x16x16xf32>, vector<4x16x16xf32>, vector<4x16x16xf32> -> vector<4x16x16xf32>
    "tpu.trace_stop"() : () -> ()
    %c0_7 = arith.constant 0 : index
    %c0_8 = arith.constant 0 : index
    %c0_9 = arith.constant 0 : index
    %5 = vector.load %arg2[%c0_7, %c0_8, %c0_9] : memref<4x16x16xf32, #tpu.memory_space<vmem>>, vector<4x16x16xf32>
    tpu.vector_store %arg2[%c0_7, %c0_8, %c0_9], %4 {strides = array<i32>} : memref<4x16x16xf32, #tpu.memory_space<vmem>>, vector<4x16x16xf32>,
    return
  }
}

</mosaic_0001>

<llo_original>
// kernel: tpu_custom_call.1
$region0: #{tpu_custom_call.1}
  #allocation0 [shape = 'u32[]', space=smem, size = 0x4, offset = 0x4, fixed_abs, tag = 'smem constant byte address 0x4 - core index']
  #allocation1 [shape = 'u32[144,128]{1,0:T(1,128)}', space=vmem, size = 0x12000, scoped, tag = 'internal scratch']
  %s0 = inlined_call_operand.hbm [shape: f32[4,16,16], index: 0, kind: input, shape index: {}]
  %s1 = inlined_call_operand.hbm [shape: f32[4,16,16], index: 1, kind: input, shape index: {}]
  %s2 = inlined_call_operand.hbm [shape: f32[4,16,16], index: 2, kind: output, shape index: {}]
  %s3 = sld [smem:[#allocation0]]
  $region26: #{tpu_custom_call.1} parent=0
    _
  %s5 = ssub.s32 1, %s3
  %s6 = scalar_select 0, %s5, %s3
  $region1: #{tpu_custom_call.1} parent=0
    #allocation2 [shape = 'u8[32768]{0}', space=vmem, size = 0x8000, scoped, tag = 'input window, operand 0, single buffered']
    #allocation3 [shape = 's32[1]{0}', space=sflag, size = 0x4, scoped, tag = 'scoped memory for tpu_custom_call.1']
    #allocation4 [shape = 's32[1]{0}', space=sflag, size = 0x4, scoped, tag = 'scoped memory for tpu_custom_call.1']
    #allocation5 [shape = 'u8[32768]{0}', space=vmem, size = 0x8000, scoped, tag = 'input window, operand 1, single buffered']
    #allocation6 [shape = 's32[1]{0}', space=sflag, size = 0x4, scoped, tag = 'scoped memory for tpu_custom_call.1']
    #allocation7 [shape = 'u8[32768]{0}', space=vmem, size = 0x8000, scoped, tag = 'output window, operand 0, single buffered']
    %7 = vsyncpa [#allocation3], 0
    %8 = vsyncpa [#allocation6], 0
    %9 = vsyncpa [#allocation4], 0
    // Predicated region
    $region2: #{tpu_custom_call.1} parent=1 // pred_check
      _
    $region3: #{tpu_custom_call.1} parent=1 // pred_check_branch
      %11 = sbr.rel (0) target = $region5
    $region4: #{tpu_custom_call.1} parent=1 // pred_region
      %s13 = ssub.s32 1024, 1024
      %14 = vsyncadd [#allocation3], %s13
      %s15 = sshll.u32 [#allocation2], 4
      %s16 = int_to_ptr.vmem [resolvable:$true] %s15
      %21 = dma.hbm_to_vmem [thread:$0]  %s0, 1024, %s16, [#allocation3], 128, 128, 8
    $region5: #{tpu_custom_call.1} parent=1 // pred_fallthru
      _
    // Predicated region
    $region6: #{tpu_custom_call.1} parent=1 // pred_check
      _
    $region7: #{tpu_custom_call.1} parent=1 // pred_check_branch
      %23 = sbr.rel (0) target = $region9
    $region8: #{tpu_custom_call.1} parent=1 // pred_region
      %s25 = ssub.s32 1024, 1024
      %26 = vsyncadd [#allocation6], %s25
      %s27 = sshll.u32 [#allocation5], 4
      %s28 = int_to_ptr.vmem [resolvable:$true] %s27
      %33 = dma.hbm_to_vmem [thread:$0]  %s1, 1024, %s28, [#allocation6], 128, 128, 8
    $region9: #{tpu_custom_call.1} parent=1 // pred_fallthru
      _
    // Predicated region
    $region10: #{tpu_custom_call.1} parent=1 // pred_check
      _
    $region11: #{tpu_custom_call.1} parent=1 // pred_check_branch
      %35 = sbr.rel (0) target = $region13
    $region12: #{tpu_custom_call.1} parent=1 // pred_region
      %36 = dma.done [#allocation3], 1024
    $region13: #{tpu_custom_call.1} parent=1 // pred_fallthru
      _
    // Predicated region
    $region14: #{tpu_custom_call.1} parent=1 // pred_check
      _
    $region15: #{tpu_custom_call.1} parent=1 // pred_check_branch
      %38 = sbr.rel (0) target = $region17
    $region16: #{tpu_custom_call.1} parent=1 // pred_region
      %39 = dma.done [#allocation6], 1024
    $region17: #{tpu_custom_call.1} parent=1 // pred_fallthru
      _
    %v40 = vld [vmem:[#allocation2] sm:$0xff]
    %v41 = vld [vmem:[#allocation2 + $0x8] sm:$0xff]
    %v42 = vld [vmem:[#allocation2 + $0x10] sm:$0xff]
    %v43 = vld [vmem:[#allocation2 + $0x18] sm:$0xff]
    %v44 = vld [vmem:[#allocation2 + $0x20] sm:$0xff]
    %v45 = vld [vmem:[#allocation2 + $0x28] sm:$0xff]
    %v46 = vld [vmem:[#allocation2 + $0x30] sm:$0xff]
    %v47 = vld [vmem:[#allocation2 + $0x38] sm:$0xff]
    %v48 = vld [vmem:[#allocation5] sm:$0xff]
    %v49 = vld [vmem:[#allocation5 + $0x8] sm:$0xff]
    %v50 = vld [vmem:[#allocation5 + $0x10] sm:$0xff]
    %v51 = vld [vmem:[#allocation5 + $0x18] sm:$0xff]
    %v52 = vld [vmem:[#allocation5 + $0x20] sm:$0xff]
    %v53 = vld [vmem:[#allocation5 + $0x28] sm:$0xff]
    %v54 = vld [vmem:[#allocation5 + $0x30] sm:$0xff]
    %v55 = vld [vmem:[#allocation5 + $0x38] sm:$0xff]
    %56 = vxpose.xlu0.b32.start [1/16] %v40, 128
    %57 = vxpose.xlu0.b32.cont [2/16] %v41, 128
    %58 = vxpose.xlu0.b32.cont [3/16] 0.0, 128
    %59 = vxpose.xlu0.b32.cont [4/16] 0.0, 128
    %60 = vxpose.xlu0.b32.cont [5/16] 0.0, 128
    %61 = vxpose.xlu0.b32.cont [6/16] 0.0, 128
    %62 = vxpose.xlu0.b32.cont [7/16] 0.0, 128
    %63 = vxpose.xlu0.b32.cont [8/16] 0.0, 128
    %64 = vxpose.xlu0.b32.cont [9/16] 0.0, 128
    %65 = vxpose.xlu0.b32.cont [10/16] 0.0, 128
    %66 = vxpose.xlu0.b32.cont [11/16] 0.0, 128
    %67 = vxpose.xlu0.b32.cont [12/16] 0.0, 128
    %68 = vxpose.xlu0.b32.cont [13/16] 0.0, 128
    %69 = vxpose.xlu0.b32.cont [14/16] 0.0, 128
    %70 = vxpose.xlu0.b32.cont [15/16] 0.0, 128
    %71 = vxpose.xlu0.b32.end [16/16] 0.0, 128
    %v72 = vpop.trf.xlu0
    %v73 = vpop.trf.xlu0
    %v74 = vpop.trf.xlu0
    %v75 = vpop.trf.xlu0
    %v76 = vpop.trf.xlu0
    %v77 = vpop.trf.xlu0
    %v78 = vpop.trf.xlu0
    %v79 = vpop.trf.xlu0
    %v80 = vpop.trf.xlu0
    %v81 = vpop.trf.xlu0
    %v82 = vpop.trf.xlu0
    %v83 = vpop.trf.xlu0
    %v84 = vpop.trf.xlu0
    %v85 = vpop.trf.xlu0
    %v86 = vpop.trf.xlu0
    %v87 = vpop.trf.xlu0
    %vm88 = vcmask 130048
    %v90 = vsel %vm88, %v72, 0
    %v93 = vsel %vm88, %v73, 0
    %95 = vmatprep.subr.mxu0 0.0
    %96 = vmatpush1.msra.mxu0 %v48
    %97 = vmatprep.subr.mxu0 0.0
    %98 = vmatpush1.msra.mxu0 %v49
    %99 = vmatprep.subr.mxu0 0.0
    %100 = vmatpush1.msra.mxu0 0.0
    %101 = vmatprep.subr.mxu0 0.0
    %102 = vmatpush1.msra.mxu0 0.0
    %103 = vmatprep.subr.mxu0 0.0
    %104 = vmatpush1.msra.mxu0 0.0
    %105 = vmatprep.subr.mxu0 0.0
    %106 = vmatpush1.msra.mxu0 0.0
    %107 = vmatprep.subr.mxu0 0.0
    %108 = vmatpush1.msra.mxu0 0.0
    %109 = vmatprep.subr.mxu0 0.0
    %110 = vmatpush1.msra.mxu0 0.0
    %111 = vmatprep.subr.mxu0 0.0
    %112 = vmatpush1.msra.mxu0 0.0
    %113 = vmatprep.subr.mxu0 0.0
    %114 = vmatpush1.msra.mxu0 0.0
    %115 = vmatprep.subr.mxu0 0.0
    %116 = vmatpush1.msra.mxu0 0.0
    %117 = vmatprep.subr.mxu0 0.0
    %118 = vmatpush1.msra.mxu0 0.0
    %119 = vmatprep.subr.mxu0 0.0
    %120 = vmatpush1.msra.mxu0 0.0
    %121 = vmatprep.subr.mxu0 0.0
    %122 = vmatpush1.msra.mxu0 0.0
    %123 = vmatprep.subr.mxu0 0.0
    %124 = vmatpush1.msra.mxu0 0.0
    %125 = vmatprep.subr.mxu0 0.0
    %126 = vmatpush1.msra.mxu0 0.0
    %127 = vmatprep.subr.mxu0 0.0
    %128 = vmatpush1.msra.mxu0 0.0
    %129 = vmatprep.subr.mxu0 0.0
    %130 = vmatpush1.msra.mxu0 0.0
    %131 = vmatprep.subr.mxu0 0.0
    %132 = vmatpush1.msra.mxu0 0.0
    %133 = vmatprep.subr.mxu0 0.0
    %134 = vmatpush1.msra.mxu0 0.0
    %135 = vmatprep.subr.mxu0 0.0
    %136 = vmatpush1.msra.mxu0 0.0
    %137 = vmatprep.subr.mxu0 0.0
    %138 = vmatpush1.msra.mxu0 0.0
    %139 = vmatprep.subr.mxu0 0.0
    %140 = vmatpush1.msra.mxu0 0.0
    %141 = vmatprep.subr.mxu0 0.0
    %142 = vmatpush1.msra.mxu0 0.0
    %143 = vmatprep.subr.mxu0 0.0
    %144 = vmatpush1.msra.mxu0 0.0
    %145 = vmatprep.subr.mxu0 0.0
    %146 = vmatpush1.msra.mxu0 0.0
    %147 = vmatprep.subr.mxu0 0.0
    %148 = vmatpush1.msra.mxu0 0.0
    %149 = vmatprep.subr.mxu0 0.0
    %150 = vmatpush1.msra.mxu0 0.0
    %151 = vmatprep.subr.mxu0 0.0
    %152 = vmatpush1.msra.mxu0 0.0
    %153 = vmatprep.subr.mxu0 0.0
    %154 = vmatpush1.msra.mxu0 0.0
    %155 = vmatprep.subr.mxu0 0.0
    %156 = vmatpush1.msra.mxu0 0.0
    %157 = vmatprep.subr.mxu0 0.0
    %158 = vmatpush1.msra.mxu0 0.0
    %159 = vmatprep.mubr.f32.mxu0 0.0
    %160 = vmatmul.mubr.f32.gmra.mrb[0].mxu0 %v90
    %v161 = vpop.f32.mrb[0].mxu0
    %v162 = vadd.f32 0.0, %v161
    %v163 = vpop.f32.mrb[0].mxu0
    %164 = vmatprep.mubr.f32.mxu0 0.0
    %165 = vmatmul.mubr.f32.gmra.mrb[0].mxu0 %v93
    %v166 = vpop.f32.mrb[0].mxu0
    %v167 = vadd.f32 0.0, %v166
    %v168 = vpop.f32.mrb[0].mxu0
    %169 = vdwg.mxu0
    %170 = vxpose.xlu0.b32.start [1/16] %v42, 128
    %171 = vxpose.xlu0.b32.cont [2/16] %v43, 128
    %172 = vxpose.xlu0.b32.cont [3/16] 0.0, 128
    %173 = vxpose.xlu0.b32.cont [4/16] 0.0, 128
    %174 = vxpose.xlu0.b32.cont [5/16] 0.0, 128
    %175 = vxpose.xlu0.b32.cont [6/16] 0.0, 128
    %176 = vxpose.xlu0.b32.cont [7/16] 0.0, 128
    %177 = vxpose.xlu0.b32.cont [8/16] 0.0, 128
    %178 = vxpose.xlu0.b32.cont [9/16] 0.0, 128
    %179 = vxpose.xlu0.b32.cont [10/16] 0.0, 128
    %180 = vxpose.xlu0.b32.cont [11/16] 0.0, 128
    %181 = vxpose.xlu0.b32.cont [12/16] 0.0, 128
    %182 = vxpose.xlu0.b32.cont [13/16] 0.0, 128
    %183 = vxpose.xlu0.b32.cont [14/16] 0.0, 128
    %184 = vxpose.xlu0.b32.cont [15/16] 0.0, 128
    %185 = vxpose.xlu0.b32.end [16/16] 0.0, 128
    %v186 = vpop.trf.xlu0
    %v187 = vpop.trf.xlu0
    %v188 = vpop.trf.xlu0
    %v189 = vpop.trf.xlu0
    %v190 = vpop.trf.xlu0
    %v191 = vpop.trf.xlu0
    %v192 = vpop.trf.xlu0
    %v193 = vpop.trf.xlu0
    %v194 = vpop.trf.xlu0
    %v195 = vpop.trf.xlu0
    %v196 = vpop.trf.xlu0
    %v197 = vpop.trf.xlu0
    %v198 = vpop.trf.xlu0
    %v199 = vpop.trf.xlu0
    %v200 = vpop.trf.xlu0
    %v201 = vpop.trf.xlu0
    %v203 = vsel %vm88, %v186, 0
    %v206 = vsel %vm88, %v187, 0
    %208 = vmatprep.subr.mxu0 0.0
    %209 = vmatpush1.msra.mxu0 %v50
    %210 = vmatprep.subr.mxu0 0.0
    %211 = vmatpush1.msra.mxu0 %v51
    %212 = vmatprep.subr.mxu0 0.0
    %213 = vmatpush1.msra.mxu0 0.0
    %214 = vmatprep.subr.mxu0 0.0
    %215 = vmatpush1.msra.mxu0 0.0
    %216 = vmatprep.subr.mxu0 0.0
    %217 = vmatpush1.msra.mxu0 0.0
    %218 = vmatprep.subr.mxu0 0.0
    %219 = vmatpush1.msra.mxu0 0.0
    %220 = vmatprep.subr.mxu0 0.0
    %221 = vmatpush1.msra.mxu0 0.0
    %222 = vmatprep.subr.mxu0 0.0
    %223 = vmatpush1.msra.mxu0 0.0
    %224 = vmatprep.subr.mxu0 0.0
    %225 = vmatpush1.msra.mxu0 0.0
    %226 = vmatprep.subr.mxu0 0.0
    %227 = vmatpush1.msra.mxu0 0.0
    %228 = vmatprep.subr.mxu0 0.0
    %229 = vmatpush1.msra.mxu0 0.0
    %230 = vmatprep.subr.mxu0 0.0
    %231 = vmatpush1.msra.mxu0 0.0
    %232 = vmatprep.subr.mxu0 0.0
    %233 = vmatpush1.msra.mxu0 0.0
    %234 = vmatprep.subr.mxu0 0.0
    %235 = vmatpush1.msra.mxu0 0.0
    %236 = vmatprep.subr.mxu0 0.0
    %237 = vmatpush1.msra.mxu0 0.0
    %238 = vmatprep.subr.mxu0 0.0
    %239 = vmatpush1.msra.mxu0 0.0
    %240 = vmatprep.subr.mxu0 0.0
    %241 = vmatpush1.msra.mxu0 0.0
    %242 = vmatprep.subr.mxu0 0.0
    %243 = vmatpush1.msra.mxu0 0.0
    %244 = vmatprep.subr.mxu0 0.0
    %245 = vmatpush1.msra.mxu0 0.0
    %246 = vmatprep.subr.mxu0 0.0
    %247 = vmatpush1.msra.mxu0 0.0
    %248 = vmatprep.subr.mxu0 0.0
    %249 = vmatpush1.msra.mxu0 0.0
    %250 = vmatprep.subr.mxu0 0.0
    %251 = vmatpush1.msra.mxu0 0.0
    %252 = vmatprep.subr.mxu0 0.0
    %253 = vmatpush1.msra.mxu0 0.0
    %254 = vmatprep.subr.mxu0 0.0
    %255 = vmatpush1.msra.mxu0 0.0
    %256 = vmatprep.subr.mxu0 0.0
    %257 = vmatpush1.msra.mxu0 0.0
    %258 = vmatprep.subr.mxu0 0.0
    %259 = vmatpush1.msra.mxu0 0.0
    %260 = vmatprep.subr.mxu0 0.0
    %261 = vmatpush1.msra.mxu0 0.0
    %262 = vmatprep.subr.mxu0 0.0
    %263 = vmatpush1.msra.mxu0 0.0
    %264 = vmatprep.subr.mxu0 0.0
    %265 = vmatpush1.msra.mxu0 0.0
    %266 = vmatprep.subr.mxu0 0.0
    %267 = vmatpush1.msra.mxu0 0.0
    %268 = vmatprep.subr.mxu0 0.0
    %269 = vmatpush1.msra.mxu0 0.0
    %270 = vmatprep.subr.mxu0 0.0
    %271 = vmatpush1.msra.mxu0 0.0
    %272 = vmatprep.mubr.f32.mxu0 0.0
    %273 = vmatmul.mubr.f32.gmra.mrb[0].mxu0 %v203
    %v274 = vpop.f32.mrb[0].mxu0
    %v275 = vadd.f32 0.0, %v274
    %v276 = vpop.f32.mrb[0].mxu0
    %277 = vmatprep.mubr.f32.mxu0 0.0
    %278 = vmatmul.mubr.f32.gmra.mrb[0].mxu0 %v206
    %v279 = vpop.f32.mrb[0].mxu0
    %v280 = vadd.f32 0.0, %v279
    %v281 = vpop.f32.mrb[0].mxu0
    %282 = vdwg.mxu0
    %283 = vxpose.xlu0.b32.start [1/16] %v44, 128
    %284 = vxpose.xlu0.b32.cont [2/16] %v45, 128
    %285 = vxpose.xlu0.b32.cont [3/16] 0.0, 128
    %286 = vxpose.xlu0.b32.cont [4/16] 0.0, 128
    %287 = vxpose.xlu0.b32.cont [5/16] 0.0, 128
    %288 = vxpose.xlu0.b32.cont [6/16] 0.0, 128
    %289 = vxpose.xlu0.b32.cont [7/16] 0.0, 128
    %290 = vxpose.xlu0.b32.cont [8/16] 0.0, 128
    %291 = vxpose.xlu0.b32.cont [9/16] 0.0, 128
    %292 = vxpose.xlu0.b32.cont [10/16] 0.0, 128
    %293 = vxpose.xlu0.b32.cont [11/16] 0.0, 128
    %294 = vxpose.xlu0.b32.cont [12/16] 0.0, 128
    %295 = vxpose.xlu0.b32.cont [13/16] 0.0, 128
    %296 = vxpose.xlu0.b32.cont [14/16] 0.0, 128
    %297 = vxpose.xlu0.b32.cont [15/16] 0.0, 128
    %298 = vxpose.xlu0.b32.end [16/16] 0.0, 128
    %v299 = vpop.trf.xlu0
    %v300 = vpop.trf.xlu0
    %v301 = vpop.trf.xlu0
    %v302 = vpop.trf.xlu0
    %v303 = vpop.trf.xlu0
    %v304 = vpop.trf.xlu0
    %v305 = vpop.trf.xlu0
    %v306 = vpop.trf.xlu0
    %v307 = vpop.trf.xlu0
    %v308 = vpop.trf.xlu0
    %v309 = vpop.trf.xlu0
    %v310 = vpop.trf.xlu0
    %v311 = vpop.trf.xlu0
    %v312 = vpop.trf.xlu0
    %v313 = vpop.trf.xlu0
    %v314 = vpop.trf.xlu0
    %v316 = vsel %vm88, %v299, 0
    %v319 = vsel %vm88, %v300, 0
    %321 = vmatprep.subr.mxu0 0.0
    %322 = vmatpush1.msra.mxu0 %v52
    %323 = vmatprep.subr.mxu0 0.0
    %324 = vmatpush1.msra.mxu0 %v53
    %325 = vmatprep.subr.mxu0 0.0
    %326 = vmatpush1.msra.mxu0 0.0
    %327 = vmatprep.subr.mxu0 0.0
    %328 = vmatpush1.msra.mxu0 0.0
    %329 = vmatprep.subr.mxu0 0.0
    %330 = vmatpush1.msra.mxu0 0.0
    %331 = vmatprep.subr.mxu0 0.0
    %332 = vmatpush1.msra.mxu0 0.0
    %333 = vmatprep.subr.mxu0 0.0
    %334 = vmatpush1.msra.mxu0 0.0
    %335 = vmatprep.subr.mxu0 0.0
    %336 = vmatpush1.msra.mxu0 0.0
    %337 = vmatprep.subr.mxu0 0.0
    %338 = vmatpush1.msra.mxu0 0.0
    %339 = vmatprep.subr.mxu0 0.0
    %340 = vmatpush1.msra.mxu0 0.0
    %341 = vmatprep.subr.mxu0 0.0
    %342 = vmatpush1.msra.mxu0 0.0
    %343 = vmatprep.subr.mxu0 0.0
    %344 = vmatpush1.msra.mxu0 0.0
    %345 = vmatprep.subr.mxu0 0.0
    %346 = vmatpush1.msra.mxu0 0.0
    %347 = vmatprep.subr.mxu0 0.0
    %348 = vmatpush1.msra.mxu0 0.0
    %349 = vmatprep.subr.mxu0 0.0
    %350 = vmatpush1.msra.mxu0 0.0
    %351 = vmatprep.subr.mxu0 0.0
    %352 = vmatpush1.msra.mxu0 0.0
    %353 = vmatprep.subr.mxu0 0.0
    %354 = vmatpush1.msra.mxu0 0.0
    %355 = vmatprep.subr.mxu0 0.0
    %356 = vmatpush1.msra.mxu0 0.0
    %357 = vmatprep.subr.mxu0 0.0
    %358 = vmatpush1.msra.mxu0 0.0
    %359 = vmatprep.subr.mxu0 0.0
    %360 = vmatpush1.msra.mxu0 0.0
    %361 = vmatprep.subr.mxu0 0.0
    %362 = vmatpush1.msra.mxu0 0.0
    %363 = vmatprep.subr.mxu0 0.0
    %364 = vmatpush1.msra.mxu0 0.0
    %365 = vmatprep.subr.mxu0 0.0
    %366 = vmatpush1.msra.mxu0 0.0
    %367 = vmatprep.subr.mxu0 0.0
    %368 = vmatpush1.msra.mxu0 0.0
    %369 = vmatprep.subr.mxu0 0.0
    %370 = vmatpush1.msra.mxu0 0.0
    %371 = vmatprep.subr.mxu0 0.0
    %372 = vmatpush1.msra.mxu0 0.0
    %373 = vmatprep.subr.mxu0 0.0
    %374 = vmatpush1.msra.mxu0 0.0
    %375 = vmatprep.subr.mxu0 0.0
    %376 = vmatpush1.msra.mxu0 0.0
    %377 = vmatprep.subr.mxu0 0.0
    %378 = vmatpush1.msra.mxu0 0.0
    %379 = vmatprep.subr.mxu0 0.0
    %380 = vmatpush1.msra.mxu0 0.0
    %381 = vmatprep.subr.mxu0 0.0
    %382 = vmatpush1.msra.mxu0 0.0
    %383 = vmatprep.subr.mxu0 0.0
    %384 = vmatpush1.msra.mxu0 0.0
    %385 = vmatprep.mubr.f32.mxu0 0.0
    %386 = vmatmul.mubr.f32.gmra.mrb[0].mxu0 %v316
    %v387 = vpop.f32.mrb[0].mxu0
    %v388 = vadd.f32 0.0, %v387
    %v389 = vpop.f32.mrb[0].mxu0
    %390 = vmatprep.mubr.f32.mxu0 0.0
    %391 = vmatmul.mubr.f32.gmra.mrb[0].mxu0 %v319
    %v392 = vpop.f32.mrb[0].mxu0
    %v393 = vadd.f32 0.0, %v392
    %v394 = vpop.f32.mrb[0].mxu0
    %395 = vdwg.mxu0
    %396 = vxpose.xlu0.b32.start [1/16] %v46, 128
    %397 = vxpose.xlu0.b32.cont [2/16] %v47, 128
    %398 = vxpose.xlu0.b32.cont [3/16] 0.0, 128
    %399 = vxpose.xlu0.b32.cont [4/16] 0.0, 128
    %400 = vxpose.xlu0.b32.cont [5/16] 0.0, 128
    %401 = vxpose.xlu0.b32.cont [6/16] 0.0, 128
    %402 = vxpose.xlu0.b32.cont [7/16] 0.0, 128
    %403 = vxpose.xlu0.b32.cont [8/16] 0.0, 128
    %404 = vxpose.xlu0.b32.cont [9/16] 0.0, 128
    %405 = vxpose.xlu0.b32.cont [10/16] 0.0, 128
    %406 = vxpose.xlu0.b32.cont [11/16] 0.0, 128
    %407 = vxpose.xlu0.b32.cont [12/16] 0.0, 128
    %408 = vxpose.xlu0.b32.cont [13/16] 0.0, 128
    %409 = vxpose.xlu0.b32.cont [14/16] 0.0, 128
    %410 = vxpose.xlu0.b32.cont [15/16] 0.0, 128
    %411 = vxpose.xlu0.b32.end [16/16] 0.0, 128
    %v412 = vpop.trf.xlu0
    %v413 = vpop.trf.xlu0
    %v414 = vpop.trf.xlu0
    %v415 = vpop.trf.xlu0
    %v416 = vpop.trf.xlu0
    %v417 = vpop.trf.xlu0
    %v418 = vpop.trf.xlu0
    %v419 = vpop.trf.xlu0
    %v420 = vpop.trf.xlu0
    %v421 = vpop.trf.xlu0
    %v422 = vpop.trf.xlu0
    %v423 = vpop.trf.xlu0
    %v424 = vpop.trf.xlu0
    %v425 = vpop.trf.xlu0
    %v426 = vpop.trf.xlu0
    %v427 = vpop.trf.xlu0
    %v429 = vsel %vm88, %v412, 0
    %v432 = vsel %vm88, %v413, 0
    %434 = vmatprep.subr.mxu0 0.0
    %435 = vmatpush1.msra.mxu0 %v54
    %436 = vmatprep.subr.mxu0 0.0
    %437 = vmatpush1.msra.mxu0 %v55
    %438 = vmatprep.subr.mxu0 0.0
    %439 = vmatpush1.msra.mxu0 0.0
    %440 = vmatprep.subr.mxu0 0.0
    %441 = vmatpush1.msra.mxu0 0.0
    %442 = vmatprep.subr.mxu0 0.0
    %443 = vmatpush1.msra.mxu0 0.0
    %444 = vmatprep.subr.mxu0 0.0
    %445 = vmatpush1.msra.mxu0 0.0
    %446 = vmatprep.subr.mxu0 0.0
    %447 = vmatpush1.msra.mxu0 0.0
    %448 = vmatprep.subr.mxu0 0.0
    %449 = vmatpush1.msra.mxu0 0.0
    %450 = vmatprep.subr.mxu0 0.0
    %451 = vmatpush1.msra.mxu0 0.0
    %452 = vmatprep.subr.mxu0 0.0
    %453 = vmatpush1.msra.mxu0 0.0
    %454 = vmatprep.subr.mxu0 0.0
    %455 = vmatpush1.msra.mxu0 0.0
    %456 = vmatprep.subr.mxu0 0.0
    %457 = vmatpush1.msra.mxu0 0.0
    %458 = vmatprep.subr.mxu0 0.0
    %459 = vmatpush1.msra.mxu0 0.0
    %460 = vmatprep.subr.mxu0 0.0
    %461 = vmatpush1.msra.mxu0 0.0
    %462 = vmatprep.subr.mxu0 0.0
    %463 = vmatpush1.msra.mxu0 0.0
    %464 = vmatprep.subr.mxu0 0.0
    %465 = vmatpush1.msra.mxu0 0.0
    %466 = vmatprep.subr.mxu0 0.0
    %467 = vmatpush1.msra.mxu0 0.0
    %468 = vmatprep.subr.mxu0 0.0
    %469 = vmatpush1.msra.mxu0 0.0
    %470 = vmatprep.subr.mxu0 0.0
    %471 = vmatpush1.msra.mxu0 0.0
    %472 = vmatprep.subr.mxu0 0.0
    %473 = vmatpush1.msra.mxu0 0.0
    %474 = vmatprep.subr.mxu0 0.0
    %475 = vmatpush1.msra.mxu0 0.0
    %476 = vmatprep.subr.mxu0 0.0
    %477 = vmatpush1.msra.mxu0 0.0
    %478 = vmatprep.subr.mxu0 0.0
    %479 = vmatpush1.msra.mxu0 0.0
    %480 = vmatprep.subr.mxu0 0.0
    %481 = vmatpush1.msra.mxu0 0.0
    %482 = vmatprep.subr.mxu0 0.0
    %483 = vmatpush1.msra.mxu0 0.0
    %484 = vmatprep.subr.mxu0 0.0
    %485 = vmatpush1.msra.mxu0 0.0
    %486 = vmatprep.subr.mxu0 0.0
    %487 = vmatpush1.msra.mxu0 0.0
    %488 = vmatprep.subr.mxu0 0.0
    %489 = vmatpush1.msra.mxu0 0.0
    %490 = vmatprep.subr.mxu0 0.0
    %491 = vmatpush1.msra.mxu0 0.0
    %492 = vmatprep.subr.mxu0 0.0
    %493 = vmatpush1.msra.mxu0 0.0
    %494 = vmatprep.subr.mxu0 0.0
    %495 = vmatpush1.msra.mxu0 0.0
    %496 = vmatprep.subr.mxu0 0.0
    %497 = vmatpush1.msra.mxu0 0.0
    %498 = vmatprep.mubr.f32.mxu0 0.0
    %499 = vmatmul.mubr.f32.gmra.mrb[0].mxu0 %v429
    %v500 = vpop.f32.mrb[0].mxu0
    %v501 = vadd.f32 0.0, %v500
    %v502 = vpop.f32.mrb[0].mxu0
    %503 = vmatprep.mubr.f32.mxu0 0.0
    %504 = vmatmul.mubr.f32.gmra.mrb[0].mxu0 %v432
    %v505 = vpop.f32.mrb[0].mxu0
    %v506 = vadd.f32 0.0, %v505
    %v507 = vpop.f32.mrb[0].mxu0
    %508 = vdwg.mxu0
    %509 = vxpose.xlu0.b32.start [1/16] %v48, 128
    %510 = vxpose.xlu0.b32.cont [2/16] %v49, 128
    %511 = vxpose.xlu0.b32.cont [3/16] 0.0, 128
    %512 = vxpose.xlu0.b32.cont [4/16] 0.0, 128
    %513 = vxpose.xlu0.b32.cont [5/16] 0.0, 128
    %514 = vxpose.xlu0.b32.cont [6/16] 0.0, 128
    %515 = vxpose.xlu0.b32.cont [7/16] 0.0, 128
    %516 = vxpose.xlu0.b32.cont [8/16] 0.0, 128
    %517 = vxpose.xlu0.b32.cont [9/16] 0.0, 128
    %518 = vxpose.xlu0.b32.cont [10/16] 0.0, 128
    %519 = vxpose.xlu0.b32.cont [11/16] 0.0, 128
    %520 = vxpose.xlu0.b32.cont [12/16] 0.0, 128
    %521 = vxpose.xlu0.b32.cont [13/16] 0.0, 128
    %522 = vxpose.xlu0.b32.cont [14/16] 0.0, 128
    %523 = vxpose.xlu0.b32.cont [15/16] 0.0, 128
    %524 = vxpose.xlu0.b32.end [16/16] 0.0, 128
    %v525 = vpop.trf.xlu0
    %v526 = vpop.trf.xlu0
    %v527 = vpop.trf.xlu0
    %v528 = vpop.trf.xlu0
    %v529 = vpop.trf.xlu0
    %v530 = vpop.trf.xlu0
    %v531 = vpop.trf.xlu0
    %v532 = vpop.trf.xlu0
    %v533 = vpop.trf.xlu0
    %v534 = vpop.trf.xlu0
    %v535 = vpop.trf.xlu0
    %v536 = vpop.trf.xlu0
    %v537 = vpop.trf.xlu0
    %v538 = vpop.trf.xlu0
    %v539 = vpop.trf.xlu0
    %v540 = vpop.trf.xlu0
    %v542 = vsel %vm88, %v525, 0
    %v545 = vsel %vm88, %v526, 0
    %547 = vmatprep.subr.mxu0 0.0
    %548 = vmatpush1.msra.mxu0 %v162
    %549 = vmatprep.subr.mxu0 0.0
    %550 = vmatpush1.msra.mxu0 %v167
    %551 = vmatprep.subr.mxu0 0.0
    %552 = vmatpush1.msra.mxu0 0.0
    %553 = vmatprep.subr.mxu0 0.0
    %554 = vmatpush1.msra.mxu0 0.0
    %555 = vmatprep.subr.mxu0 0.0
    %556 = vmatpush1.msra.mxu0 0.0
    %557 = vmatprep.subr.mxu0 0.0
    %558 = vmatpush1.msra.mxu0 0.0
    %559 = vmatprep.subr.mxu0 0.0
    %560 = vmatpush1.msra.mxu0 0.0
    %561 = vmatprep.subr.mxu0 0.0
    %562 = vmatpush1.msra.mxu0 0.0
    %563 = vmatprep.subr.mxu0 0.0
    %564 = vmatpush1.msra.mxu0 0.0
    %565 = vmatprep.subr.mxu0 0.0
    %566 = vmatpush1.msra.mxu0 0.0
    %567 = vmatprep.subr.mxu0 0.0
    %568 = vmatpush1.msra.mxu0 0.0
    %569 = vmatprep.subr.mxu0 0.0
    %570 = vmatpush1.msra.mxu0 0.0
    %571 = vmatprep.subr.mxu0 0.0
    %572 = vmatpush1.msra.mxu0 0.0
    %573 = vmatprep.subr.mxu0 0.0
    %574 = vmatpush1.msra.mxu0 0.0
    %575 = vmatprep.subr.mxu0 0.0
    %576 = vmatpush1.msra.mxu0 0.0
    %577 = vmatprep.subr.mxu0 0.0
    %578 = vmatpush1.msra.mxu0 0.0
    %579 = vmatprep.subr.mxu0 0.0
    %580 = vmatpush1.msra.mxu0 0.0
    %581 = vmatprep.subr.mxu0 0.0
    %582 = vmatpush1.msra.mxu0 0.0
    %583 = vmatprep.subr.mxu0 0.0
    %584 = vmatpush1.msra.mxu0 0.0
    %585 = vmatprep.subr.mxu0 0.0
    %586 = vmatpush1.msra.mxu0 0.0
    %587 = vmatprep.subr.mxu0 0.0
    %588 = vmatpush1.msra.mxu0 0.0
    %589 = vmatprep.subr.mxu0 0.0
    %590 = vmatpush1.msra.mxu0 0.0
    %591 = vmatprep.subr.mxu0 0.0
    %592 = vmatpush1.msra.mxu0 0.0
    %593 = vmatprep.subr.mxu0 0.0
    %594 = vmatpush1.msra.mxu0 0.0
    %595 = vmatprep.subr.mxu0 0.0
    %596 = vmatpush1.msra.mxu0 0.0
    %597 = vmatprep.subr.mxu0 0.0
    %598 = vmatpush1.msra.mxu0 0.0
    %599 = vmatprep.subr.mxu0 0.0
    %600 = vmatpush1.msra.mxu0 0.0
    %601 = vmatprep.subr.mxu0 0.0
    %602 = vmatpush1.msra.mxu0 0.0
    %603 = vmatprep.subr.mxu0 0.0
    %604 = vmatpush1.msra.mxu0 0.0
    %605 = vmatprep.subr.mxu0 0.0
    %606 = vmatpush1.msra.mxu0 0.0
    %607 = vmatprep.subr.mxu0 0.0
    %608 = vmatpush1.msra.mxu0 0.0
    %609 = vmatprep.subr.mxu0 0.0
    %610 = vmatpush1.msra.mxu0 0.0
    %611 = vmatprep.mubr.f32.mxu0 0.0
    %612 = vmatmul.mubr.f32.gmra.mrb[0].mxu0 %v542
    %v613 = vpop.f32.mrb[0].mxu0
    %v614 = vadd.f32 0.0, %v613
    %v615 = vpop.f32.mrb[0].mxu0
    %616 = vmatprep.mubr.f32.mxu0 0.0
    %617 = vmatmul.mubr.f32.gmra.mrb[0].mxu0 %v545
    %v618 = vpop.f32.mrb[0].mxu0
    %v619 = vadd.f32 0.0, %v618
    %v620 = vpop.f32.mrb[0].mxu0
    %621 = vdwg.mxu0
    %622 = vxpose.xlu0.b32.start [1/16] %v50, 128
    %623 = vxpose.xlu0.b32.cont [2/16] %v51, 128
    %624 = vxpose.xlu0.b32.cont [3/16] 0.0, 128
    %625 = vxpose.xlu0.b32.cont [4/16] 0.0, 128
    %626 = vxpose.xlu0.b32.cont [5/16] 0.0, 128
    %627 = vxpose.xlu0.b32.cont [6/16] 0.0, 128
    %628 = vxpose.xlu0.b32.cont [7/16] 0.0, 128
    %629 = vxpose.xlu0.b32.cont [8/16] 0.0, 128
    %630 = vxpose.xlu0.b32.cont [9/16] 0.0, 128
    %631 = vxpose.xlu0.b32.cont [10/16] 0.0, 128
    %632 = vxpose.xlu0.b32.cont [11/16] 0.0, 128
    %633 = vxpose.xlu0.b32.cont [12/16] 0.0, 128
    %634 = vxpose.xlu0.b32.cont [13/16] 0.0, 128
    %635 = vxpose.xlu0.b32.cont [14/16] 0.0, 128
    %636 = vxpose.xlu0.b32.cont [15/16] 0.0, 128
    %637 = vxpose.xlu0.b32.end [16/16] 0.0, 128
    %v638 = vpop.trf.xlu0
    %v639 = vpop.trf.xlu0
    %v640 = vpop.trf.xlu0
    %v641 = vpop.trf.xlu0
    %v642 = vpop.trf.xlu0
    %v643 = vpop.trf.xlu0
    %v644 = vpop.trf.xlu0
    %v645 = vpop.trf.xlu0
    %v646 = vpop.trf.xlu0
    %v647 = vpop.trf.xlu0
    %v648 = vpop.trf.xlu0
    %v649 = vpop.trf.xlu0
    %v650 = vpop.trf.xlu0
    %v651 = vpop.trf.xlu0
    %v652 = vpop.trf.xlu0
    %v653 = vpop.trf.xlu0
    %v655 = vsel %vm88, %v638, 0
    %v658 = vsel %vm88, %v639, 0
    %660 = vmatprep.subr.mxu0 0.0
    %661 = vmatpush1.msra.mxu0 %v275
    %662 = vmatprep.subr.mxu0 0.0
    %663 = vmatpush1.msra.mxu0 %v280
    %664 = vmatprep.subr.mxu0 0.0
    %665 = vmatpush1.msra.mxu0 0.0
    %666 = vmatprep.subr.mxu0 0.0
    %667 = vmatpush1.msra.mxu0 0.0
    %668 = vmatprep.subr.mxu0 0.0
    %669 = vmatpush1.msra.mxu0 0.0
    %670 = vmatprep.subr.mxu0 0.0
    %671 = vmatpush1.msra.mxu0 0.0
    %672 = vmatprep.subr.mxu0 0.0
    %673 = vmatpush1.msra.mxu0 0.0
    %674 = vmatprep.subr.mxu0 0.0
    %675 = vmatpush1.msra.mxu0 0.0
    %676 = vmatprep.subr.mxu0 0.0
    %677 = vmatpush1.msra.mxu0 0.0
    %678 = vmatprep.subr.mxu0 0.0
    %679 = vmatpush1.msra.mxu0 0.0
    %680 = vmatprep.subr.mxu0 0.0
    %681 = vmatpush1.msra.mxu0 0.0
    %682 = vmatprep.subr.mxu0 0.0
    %683 = vmatpush1.msra.mxu0 0.0
    %684 = vmatprep.subr.mxu0 0.0
    %685 = vmatpush1.msra.mxu0 0.0
    %686 = vmatprep.subr.mxu0 0.0
    %687 = vmatpush1.msra.mxu0 0.0
    %688 = vmatprep.subr.mxu0 0.0
    %689 = vmatpush1.msra.mxu0 0.0
    %690 = vmatprep.subr.mxu0 0.0
    %691 = vmatpush1.msra.mxu0 0.0
    %692 = vmatprep.subr.mxu0 0.0
    %693 = vmatpush1.msra.mxu0 0.0
    %694 = vmatprep.subr.mxu0 0.0
    %695 = vmatpush1.msra.mxu0 0.0
    %696 = vmatprep.subr.mxu0 0.0
    %697 = vmatpush1.msra.mxu0 0.0
    %698 = vmatprep.subr.mxu0 0.0
    %699 = vmatpush1.msra.mxu0 0.0
    %700 = vmatprep.subr.mxu0 0.0
    %701 = vmatpush1.msra.mxu0 0.0
    %702 = vmatprep.subr.mxu0 0.0
    %703 = vmatpush1.msra.mxu0 0.0
    %704 = vmatprep.subr.mxu0 0.0
    %705 = vmatpush1.msra.mxu0 0.0
    %706 = vmatprep.subr.mxu0 0.0
    %707 = vmatpush1.msra.mxu0 0.0
    %708 = vmatprep.subr.mxu0 0.0
    %709 = vmatpush1.msra.mxu0 0.0
    %710 = vmatprep.subr.mxu0 0.0
    %711 = vmatpush1.msra.mxu0 0.0
    %712 = vmatprep.subr.mxu0 0.0
    %713 = vmatpush1.msra.mxu0 0.0
    %714 = vmatprep.subr.mxu0 0.0
    %715 = vmatpush1.msra.mxu0 0.0
    %716 = vmatprep.subr.mxu0 0.0
    %717 = vmatpush1.msra.mxu0 0.0
    %718 = vmatprep.subr.mxu0 0.0
    %719 = vmatpush1.msra.mxu0 0.0
    %720 = vmatprep.subr.mxu0 0.0
    %721 = vmatpush1.msra.mxu0 0.0
    %722 = vmatprep.subr.mxu0 0.0
    %723 = vmatpush1.msra.mxu0 0.0
    %724 = vmatprep.mubr.f32.mxu0 0.0
    %725 = vmatmul.mubr.f32.gmra.mrb[0].mxu0 %v655
    %v726 = vpop.f32.mrb[0].mxu0
    %v727 = vadd.f32 0.0, %v726
    %v728 = vpop.f32.mrb[0].mxu0
    %729 = vmatprep.mubr.f32.mxu0 0.0
    %730 = vmatmul.mubr.f32.gmra.mrb[0].mxu0 %v658
    %v731 = vpop.f32.mrb[0].mxu0
    %v732 = vadd.f32 0.0, %v731
    %v733 = vpop.f32.mrb[0].mxu0
    %734 = vdwg.mxu0
    %735 = vxpose.xlu0.b32.start [1/16] %v52, 128
    %736 = vxpose.xlu0.b32.cont [2/16] %v53, 128
    %737 = vxpose.xlu0.b32.cont [3/16] 0.0, 128
    %738 = vxpose.xlu0.b32.cont [4/16] 0.0, 128
    %739 = vxpose.xlu0.b32.cont [5/16] 0.0, 128
    %740 = vxpose.xlu0.b32.cont [6/16] 0.0, 128
    %741 = vxpose.xlu0.b32.cont [7/16] 0.0, 128
    %742 = vxpose.xlu0.b32.cont [8/16] 0.0, 128
    %743 = vxpose.xlu0.b32.cont [9/16] 0.0, 128
    %744 = vxpose.xlu0.b32.cont [10/16] 0.0, 128
    %745 = vxpose.xlu0.b32.cont [11/16] 0.0, 128
    %746 = vxpose.xlu0.b32.cont [12/16] 0.0, 128
    %747 = vxpose.xlu0.b32.cont [13/16] 0.0, 128
    %748 = vxpose.xlu0.b32.cont [14/16] 0.0, 128
    %749 = vxpose.xlu0.b32.cont [15/16] 0.0, 128
    %750 = vxpose.xlu0.b32.end [16/16] 0.0, 128
    %v751 = vpop.trf.xlu0
    %v752 = vpop.trf.xlu0
    %v753 = vpop.trf.xlu0
    %v754 = vpop.trf.xlu0
    %v755 = vpop.trf.xlu0
    %v756 = vpop.trf.xlu0
    %v757 = vpop.trf.xlu0
    %v758 = vpop.trf.xlu0
    %v759 = vpop.trf.xlu0
    %v760 = vpop.trf.xlu0
    %v761 = vpop.trf.xlu0
    %v762 = vpop.trf.xlu0
    %v763 = vpop.trf.xlu0
    %v764 = vpop.trf.xlu0
    %v765 = vpop.trf.xlu0
    %v766 = vpop.trf.xlu0
    %v768 = vsel %vm88, %v751, 0
    %v771 = vsel %vm88, %v752, 0
    %773 = vmatprep.subr.mxu0 0.0
    %774 = vmatpush1.msra.mxu0 %v388
    %775 = vmatprep.subr.mxu0 0.0
    %776 = vmatpush1.msra.mxu0 %v393
    %777 = vmatprep.subr.mxu0 0.0
    %778 = vmatpush1.msra.mxu0 0.0
    %779 = vmatprep.subr.mxu0 0.0
    %780 = vmatpush1.msra.mxu0 0.0
    %781 = vmatprep.subr.mxu0 0.0
    %782 = vmatpush1.msra.mxu0 0.0
    %783 = vmatprep.subr.mxu0 0.0
    %784 = vmatpush1.msra.mxu0 0.0
    %785 = vmatprep.subr.mxu0 0.0
    %786 = vmatpush1.msra.mxu0 0.0
    %787 = vmatprep.subr.mxu0 0.0
    %788 = vmatpush1.msra.mxu0 0.0
    %789 = vmatprep.subr.mxu0 0.0
    %790 = vmatpush1.msra.mxu0 0.0
    %791 = vmatprep.subr.mxu0 0.0
    %792 = vmatpush1.msra.mxu0 0.0
    %793 = vmatprep.subr.mxu0 0.0
    %794 = vmatpush1.msra.mxu0 0.0
    %795 = vmatprep.subr.mxu0 0.0
    %796 = vmatpush1.msra.mxu0 0.0
    %797 = vmatprep.subr.mxu0 0.0
    %798 = vmatpush1.msra.mxu0 0.0
    %799 = vmatprep.subr.mxu0 0.0
    %800 = vmatpush1.msra.mxu0 0.0
    %801 = vmatprep.subr.mxu0 0.0
    %802 = vmatpush1.msra.mxu0 0.0
    %803 = vmatprep.subr.mxu0 0.0
    %804 = vmatpush1.msra.mxu0 0.0
    %805 = vmatprep.subr.mxu0 0.0
    %806 = vmatpush1.msra.mxu0 0.0
    %807 = vmatprep.subr.mxu0 0.0
    %808 = vmatpush1.msra.mxu0 0.0
    %809 = vmatprep.subr.mxu0 0.0
    %810 = vmatpush1.msra.mxu0 0.0
    %811 = vmatprep.subr.mxu0 0.0
    %812 = vmatpush1.msra.mxu0 0.0
    %813 = vmatprep.subr.mxu0 0.0
    %814 = vmatpush1.msra.mxu0 0.0
    %815 = vmatprep.subr.mxu0 0.0
    %816 = vmatpush1.msra.mxu0 0.0
    %817 = vmatprep.subr.mxu0 0.0
    %818 = vmatpush1.msra.mxu0 0.0
    %819 = vmatprep.subr.mxu0 0.0
    %820 = vmatpush1.msra.mxu0 0.0
    %821 = vmatprep.subr.mxu0 0.0
    %822 = vmatpush1.msra.mxu0 0.0
    %823 = vmatprep.subr.mxu0 0.0
    %824 = vmatpush1.msra.mxu0 0.0
    %825 = vmatprep.subr.mxu0 0.0
    %826 = vmatpush1.msra.mxu0 0.0
    %827 = vmatprep.subr.mxu0 0.0
    %828 = vmatpush1.msra.mxu0 0.0
    %829 = vmatprep.subr.mxu0 0.0
    %830 = vmatpush1.msra.mxu0 0.0
    %831 = vmatprep.subr.mxu0 0.0
    %832 = vmatpush1.msra.mxu0 0.0
    %833 = vmatprep.subr.mxu0 0.0
    %834 = vmatpush1.msra.mxu0 0.0
    %835 = vmatprep.subr.mxu0 0.0
    %836 = vmatpush1.msra.mxu0 0.0
    %837 = vmatprep.mubr.f32.mxu0 0.0
    %838 = vmatmul.mubr.f32.gmra.mrb[0].mxu0 %v768
    %v839 = vpop.f32.mrb[0].mxu0
    %v840 = vadd.f32 0.0, %v839
    %v841 = vpop.f32.mrb[0].mxu0
    %842 = vmatprep.mubr.f32.mxu0 0.0
    %843 = vmatmul.mubr.f32.gmra.mrb[0].mxu0 %v771
    %v844 = vpop.f32.mrb[0].mxu0
    %v845 = vadd.f32 0.0, %v844
    %v846 = vpop.f32.mrb[0].mxu0
    %847 = vdwg.mxu0
    %848 = vxpose.xlu0.b32.start [1/16] %v54, 128
    %849 = vxpose.xlu0.b32.cont [2/16] %v55, 128
    %850 = vxpose.xlu0.b32.cont [3/16] 0.0, 128
    %851 = vxpose.xlu0.b32.cont [4/16] 0.0, 128
    %852 = vxpose.xlu0.b32.cont [5/16] 0.0, 128
    %853 = vxpose.xlu0.b32.cont [6/16] 0.0, 128
    %854 = vxpose.xlu0.b32.cont [7/16] 0.0, 128
    %855 = vxpose.xlu0.b32.cont [8/16] 0.0, 128
    %856 = vxpose.xlu0.b32.cont [9/16] 0.0, 128
    %857 = vxpose.xlu0.b32.cont [10/16] 0.0, 128
    %858 = vxpose.xlu0.b32.cont [11/16] 0.0, 128
    %859 = vxpose.xlu0.b32.cont [12/16] 0.0, 128
    %860 = vxpose.xlu0.b32.cont [13/16] 0.0, 128
    %861 = vxpose.xlu0.b32.cont [14/16] 0.0, 128
    %862 = vxpose.xlu0.b32.cont [15/16] 0.0, 128
    %863 = vxpose.xlu0.b32.end [16/16] 0.0, 128
    %v864 = vpop.trf.xlu0
    %v865 = vpop.trf.xlu0
    %v866 = vpop.trf.xlu0
    %v867 = vpop.trf.xlu0
    %v868 = vpop.trf.xlu0
    %v869 = vpop.trf.xlu0
    %v870 = vpop.trf.xlu0
    %v871 = vpop.trf.xlu0
    %v872 = vpop.trf.xlu0
    %v873 = vpop.trf.xlu0
    %v874 = vpop.trf.xlu0
    %v875 = vpop.trf.xlu0
    %v876 = vpop.trf.xlu0
    %v877 = vpop.trf.xlu0
    %v878 = vpop.trf.xlu0
    %v879 = vpop.trf.xlu0
    %v881 = vsel %vm88, %v864, 0
    %v884 = vsel %vm88, %v865, 0
    %886 = vmatprep.subr.mxu0 0.0
    %887 = vmatpush1.msra.mxu0 %v501
    %888 = vmatprep.subr.mxu0 0.0
    %889 = vmatpush1.msra.mxu0 %v506
    %890 = vmatprep.subr.mxu0 0.0
    %891 = vmatpush1.msra.mxu0 0.0
    %892 = vmatprep.subr.mxu0 0.0
    %893 = vmatpush1.msra.mxu0 0.0
    %894 = vmatprep.subr.mxu0 0.0
    %895 = vmatpush1.msra.mxu0 0.0
    %896 = vmatprep.subr.mxu0 0.0
    %897 = vmatpush1.msra.mxu0 0.0
    %898 = vmatprep.subr.mxu0 0.0
    %899 = vmatpush1.msra.mxu0 0.0
    %900 = vmatprep.subr.mxu0 0.0
    %901 = vmatpush1.msra.mxu0 0.0
    %902 = vmatprep.subr.mxu0 0.0
    %903 = vmatpush1.msra.mxu0 0.0
    %904 = vmatprep.subr.mxu0 0.0
    %905 = vmatpush1.msra.mxu0 0.0
    %906 = vmatprep.subr.mxu0 0.0
    %907 = vmatpush1.msra.mxu0 0.0
    %908 = vmatprep.subr.mxu0 0.0
    %909 = vmatpush1.msra.mxu0 0.0
    %910 = vmatprep.subr.mxu0 0.0
    %911 = vmatpush1.msra.mxu0 0.0
    %912 = vmatprep.subr.mxu0 0.0
    %913 = vmatpush1.msra.mxu0 0.0
    %914 = vmatprep.subr.mxu0 0.0
    %915 = vmatpush1.msra.mxu0 0.0
    %916 = vmatprep.subr.mxu0 0.0
    %917 = vmatpush1.msra.mxu0 0.0
    %918 = vmatprep.subr.mxu0 0.0
    %919 = vmatpush1.msra.mxu0 0.0
    %920 = vmatprep.subr.mxu0 0.0
    %921 = vmatpush1.msra.mxu0 0.0
    %922 = vmatprep.subr.mxu0 0.0
    %923 = vmatpush1.msra.mxu0 0.0
    %924 = vmatprep.subr.mxu0 0.0
    %925 = vmatpush1.msra.mxu0 0.0
    %926 = vmatprep.subr.mxu0 0.0
    %927 = vmatpush1.msra.mxu0 0.0
    %928 = vmatprep.subr.mxu0 0.0
    %929 = vmatpush1.msra.mxu0 0.0
    %930 = vmatprep.subr.mxu0 0.0
    %931 = vmatpush1.msra.mxu0 0.0
    %932 = vmatprep.subr.mxu0 0.0
    %933 = vmatpush1.msra.mxu0 0.0
    %934 = vmatprep.subr.mxu0 0.0
    %935 = vmatpush1.msra.mxu0 0.0
    %936 = vmatprep.subr.mxu0 0.0
    %937 = vmatpush1.msra.mxu0 0.0
    %938 = vmatprep.subr.mxu0 0.0
    %939 = vmatpush1.msra.mxu0 0.0
    %940 = vmatprep.subr.mxu0 0.0
    %941 = vmatpush1.msra.mxu0 0.0
    %942 = vmatprep.subr.mxu0 0.0
    %943 = vmatpush1.msra.mxu0 0.0
    %944 = vmatprep.subr.mxu0 0.0
    %945 = vmatpush1.msra.mxu0 0.0
    %946 = vmatprep.subr.mxu0 0.0
    %947 = vmatpush1.msra.mxu0 0.0
    %948 = vmatprep.subr.mxu0 0.0
    %949 = vmatpush1.msra.mxu0 0.0
    %950 = vmatprep.mubr.f32.mxu0 0.0
    %951 = vmatmul.mubr.f32.gmra.mrb[0].mxu0 %v881
    %v952 = vpop.f32.mrb[0].mxu0
    %v953 = vadd.f32 0.0, %v952
    %v954 = vpop.f32.mrb[0].mxu0
    %955 = vmatprep.mubr.f32.mxu0 0.0
    %956 = vmatmul.mubr.f32.gmra.mrb[0].mxu0 %v884
    %v957 = vpop.f32.mrb[0].mxu0
    %v958 = vadd.f32 0.0, %v957
    %v959 = vpop.f32.mrb[0].mxu0
    %960 = vdwg.mxu0
    %v962 = vsel %vm88, %v614, 0
    %v965 = vsel %vm88, %v619, 0
    %967 = vmatprep.subr.mxu0 0.0
    %968 = vmatpush1.msra.mxu0 %v614
    %969 = vmatprep.subr.mxu0 0.0
    %970 = vmatpush1.msra.mxu0 %v619
    %971 = vmatprep.subr.mxu0 0.0
    %972 = vmatpush1.msra.mxu0 0.0
    %973 = vmatprep.subr.mxu0 0.0
    %974 = vmatpush1.msra.mxu0 0.0
    %975 = vmatprep.subr.mxu0 0.0
    %976 = vmatpush1.msra.mxu0 0.0
    %977 = vmatprep.subr.mxu0 0.0
    %978 = vmatpush1.msra.mxu0 0.0
    %979 = vmatprep.subr.mxu0 0.0
    %980 = vmatpush1.msra.mxu0 0.0
    %981 = vmatprep.subr.mxu0 0.0
    %982 = vmatpush1.msra.mxu0 0.0
    %983 = vmatprep.subr.mxu0 0.0
    %984 = vmatpush1.msra.mxu0 0.0
    %985 = vmatprep.subr.mxu0 0.0
    %986 = vmatpush1.msra.mxu0 0.0
    %987 = vmatprep.subr.mxu0 0.0
    %988 = vmatpush1.msra.mxu0 0.0
    %989 = vmatprep.subr.mxu0 0.0
    %990 = vmatpush1.msra.mxu0 0.0
    %991 = vmatprep.subr.mxu0 0.0
    %992 = vmatpush1.msra.mxu0 0.0
    %993 = vmatprep.subr.mxu0 0.0
    %994 = vmatpush1.msra.mxu0 0.0
    %995 = vmatprep.subr.mxu0 0.0
    %996 = vmatpush1.msra.mxu0 0.0
    %997 = vmatprep.subr.mxu0 0.0
    %998 = vmatpush1.msra.mxu0 0.0
    %999 = vmatprep.subr.mxu0 0.0
    %1000 = vmatpush1.msra.mxu0 0.0
    %1001 = vmatprep.subr.mxu0 0.0
    %1002 = vmatpush1.msra.mxu0 0.0
    %1003 = vmatprep.subr.mxu0 0.0
    %1004 = vmatpush1.msra.mxu0 0.0
    %1005 = vmatprep.subr.mxu0 0.0
    %1006 = vmatpush1.msra.mxu0 0.0
    %1007 = vmatprep.subr.mxu0 0.0
    %1008 = vmatpush1.msra.mxu0 0.0
    %1009 = vmatprep.subr.mxu0 0.0
    %1010 = vmatpush1.msra.mxu0 0.0
    %1011 = vmatprep.subr.mxu0 0.0
    %1012 = vmatpush1.msra.mxu0 0.0
    %1013 = vmatprep.subr.mxu0 0.0
    %1014 = vmatpush1.msra.mxu0 0.0
    %1015 = vmatprep.subr.mxu0 0.0
    %1016 = vmatpush1.msra.mxu0 0.0
    %1017 = vmatprep.subr.mxu0 0.0
    %1018 = vmatpush1.msra.mxu0 0.0
    %1019 = vmatprep.subr.mxu0 0.0
    %1020 = vmatpush1.msra.mxu0 0.0
    %1021 = vmatprep.subr.mxu0 0.0
    %1022 = vmatpush1.msra.mxu0 0.0
    %1023 = vmatprep.subr.mxu0 0.0
    %1024 = vmatpush1.msra.mxu0 0.0
    %1025 = vmatprep.subr.mxu0 0.0
    %1026 = vmatpush1.msra.mxu0 0.0
    %1027 = vmatprep.subr.mxu0 0.0
    %1028 = vmatpush1.msra.mxu0 0.0
    %1029 = vmatprep.subr.mxu0 0.0
    %1030 = vmatpush1.msra.mxu0 0.0
    %1031 = vmatprep.mubr.f32.mxu0 0.0
    %1032 = vmatmul.mubr.f32.gmra.mrb[0].mxu0 %v962
    %v1033 = vpop.f32.mrb[0].mxu0
    %v1034 = vadd.f32 0.0, %v1033
    %v1035 = vpop.f32.mrb[0].mxu0
    %1036 = vmatprep.mubr.f32.mxu0 0.0
    %1037 = vmatmul.mubr.f32.gmra.mrb[0].mxu0 %v965
    %v1038 = vpop.f32.mrb[0].mxu0
    %v1039 = vadd.f32 0.0, %v1038
    %v1040 = vpop.f32.mrb[0].mxu0
    %1041 = vdwg.mxu0
    %v1043 = vsel %vm88, %v727, 0
    %v1046 = vsel %vm88, %v732, 0
    %1048 = vmatprep.subr.mxu0 0.0
    %1049 = vmatpush1.msra.mxu0 %v727
    %1050 = vmatprep.subr.mxu0 0.0
    %1051 = vmatpush1.msra.mxu0 %v732
    %1052 = vmatprep.subr.mxu0 0.0
    %1053 = vmatpush1.msra.mxu0 0.0
    %1054 = vmatprep.subr.mxu0 0.0
    %1055 = vmatpush1.msra.mxu0 0.0
    %1056 = vmatprep.subr.mxu0 0.0
    %1057 = vmatpush1.msra.mxu0 0.0
    %1058 = vmatprep.subr.mxu0 0.0
    %1059 = vmatpush1.msra.mxu0 0.0
    %1060 = vmatprep.subr.mxu0 0.0
    %1061 = vmatpush1.msra.mxu0 0.0
    %1062 = vmatprep.subr.mxu0 0.0
    %1063 = vmatpush1.msra.mxu0 0.0
    %1064 = vmatprep.subr.mxu0 0.0
    %1065 = vmatpush1.msra.mxu0 0.0
    %1066 = vmatprep.subr.mxu0 0.0
    %1067 = vmatpush1.msra.mxu0 0.0
    %1068 = vmatprep.subr.mxu0 0.0
    %1069 = vmatpush1.msra.mxu0 0.0
    %1070 = vmatprep.subr.mxu0 0.0
    %1071 = vmatpush1.msra.mxu0 0.0
    %1072 = vmatprep.subr.mxu0 0.0
    %1073 = vmatpush1.msra.mxu0 0.0
    %1074 = vmatprep.subr.mxu0 0.0
    %1075 = vmatpush1.msra.mxu0 0.0
    %1076 = vmatprep.subr.mxu0 0.0
    %1077 = vmatpush1.msra.mxu0 0.0
    %1078 = vmatprep.subr.mxu0 0.0
    %1079 = vmatpush1.msra.mxu0 0.0
    %1080 = vmatprep.subr.mxu0 0.0
    %1081 = vmatpush1.msra.mxu0 0.0
    %1082 = vmatprep.subr.mxu0 0.0
    %1083 = vmatpush1.msra.mxu0 0.0
    %1084 = vmatprep.subr.mxu0 0.0
    %1085 = vmatpush1.msra.mxu0 0.0
    %1086 = vmatprep.subr.mxu0 0.0
    %1087 = vmatpush1.msra.mxu0 0.0
    %1088 = vmatprep.subr.mxu0 0.0
    %1089 = vmatpush1.msra.mxu0 0.0
    %1090 = vmatprep.subr.mxu0 0.0
    %1091 = vmatpush1.msra.mxu0 0.0
    %1092 = vmatprep.subr.mxu0 0.0
    %1093 = vmatpush1.msra.mxu0 0.0
    %1094 = vmatprep.subr.mxu0 0.0
    %1095 = vmatpush1.msra.mxu0 0.0
    %1096 = vmatprep.subr.mxu0 0.0
    %1097 = vmatpush1.msra.mxu0 0.0
    %1098 = vmatprep.subr.mxu0 0.0
    %1099 = vmatpush1.msra.mxu0 0.0
    %1100 = vmatprep.subr.mxu0 0.0
    %1101 = vmatpush1.msra.mxu0 0.0
    %1102 = vmatprep.subr.mxu0 0.0
    %1103 = vmatpush1.msra.mxu0 0.0
    %1104 = vmatprep.subr.mxu0 0.0
    %1105 = vmatpush1.msra.mxu0 0.0
    %1106 = vmatprep.subr.mxu0 0.0
    %1107 = vmatpush1.msra.mxu0 0.0
    %1108 = vmatprep.subr.mxu0 0.0
    %1109 = vmatpush1.msra.mxu0 0.0
    %1110 = vmatprep.subr.mxu0 0.0
    %1111 = vmatpush1.msra.mxu0 0.0
    %1112 = vmatprep.mubr.f32.mxu0 0.0
    %1113 = vmatmul.mubr.f32.gmra.mrb[0].mxu0 %v1043
    %v1114 = vpop.f32.mrb[0].mxu0
    %v1115 = vadd.f32 0.0, %v1114
    %v1116 = vpop.f32.mrb[0].mxu0
    %1117 = vmatprep.mubr.f32.mxu0 0.0
    %1118 = vmatmul.mubr.f32.gmra.mrb[0].mxu0 %v1046
    %v1119 = vpop.f32.mrb[0].mxu0
    %v1120 = vadd.f32 0.0, %v1119
    %v1121 = vpop.f32.mrb[0].mxu0
    %1122 = vdwg.mxu0
    %v1124 = vsel %vm88, %v840, 0
    %v1127 = vsel %vm88, %v845, 0
    %1129 = vmatprep.subr.mxu0 0.0
    %1130 = vmatpush1.msra.mxu0 %v840
    %1131 = vmatprep.subr.mxu0 0.0
    %1132 = vmatpush1.msra.mxu0 %v845
    %1133 = vmatprep.subr.mxu0 0.0
    %1134 = vmatpush1.msra.mxu0 0.0
    %1135 = vmatprep.subr.mxu0 0.0
    %1136 = vmatpush1.msra.mxu0 0.0
    %1137 = vmatprep.subr.mxu0 0.0
    %1138 = vmatpush1.msra.mxu0 0.0
    %1139 = vmatprep.subr.mxu0 0.0
    %1140 = vmatpush1.msra.mxu0 0.0
    %1141 = vmatprep.subr.mxu0 0.0
    %1142 = vmatpush1.msra.mxu0 0.0
    %1143 = vmatprep.subr.mxu0 0.0
    %1144 = vmatpush1.msra.mxu0 0.0
    %1145 = vmatprep.subr.mxu0 0.0
    %1146 = vmatpush1.msra.mxu0 0.0
    %1147 = vmatprep.subr.mxu0 0.0
    %1148 = vmatpush1.msra.mxu0 0.0
    %1149 = vmatprep.subr.mxu0 0.0
    %1150 = vmatpush1.msra.mxu0 0.0
    %1151 = vmatprep.subr.mxu0 0.0
    %1152 = vmatpush1.msra.mxu0 0.0
    %1153 = vmatprep.subr.mxu0 0.0
    %1154 = vmatpush1.msra.mxu0 0.0
    %1155 = vmatprep.subr.mxu0 0.0
    %1156 = vmatpush1.msra.mxu0 0.0
    %1157 = vmatprep.subr.mxu0 0.0
    %1158 = vmatpush1.msra.mxu0 0.0
    %1159 = vmatprep.subr.mxu0 0.0
    %1160 = vmatpush1.msra.mxu0 0.0
    %1161 = vmatprep.subr.mxu0 0.0
    %1162 = vmatpush1.msra.mxu0 0.0
    %1163 = vmatprep.subr.mxu0 0.0
    %1164 = vmatpush1.msra.mxu0 0.0
    %1165 = vmatprep.subr.mxu0 0.0
    %1166 = vmatpush1.msra.mxu0 0.0
    %1167 = vmatprep.subr.mxu0 0.0
    %1168 = vmatpush1.msra.mxu0 0.0
    %1169 = vmatprep.subr.mxu0 0.0
    %1170 = vmatpush1.msra.mxu0 0.0
    %1171 = vmatprep.subr.mxu0 0.0
    %1172 = vmatpush1.msra.mxu0 0.0
    %1173 = vmatprep.subr.mxu0 0.0
    %1174 = vmatpush1.msra.mxu0 0.0
    %1175 = vmatprep.subr.mxu0 0.0
    %1176 = vmatpush1.msra.mxu0 0.0
    %1177 = vmatprep.subr.mxu0 0.0
    %1178 = vmatpush1.msra.mxu0 0.0
    %1179 = vmatprep.subr.mxu0 0.0
    %1180 = vmatpush1.msra.mxu0 0.0
    %1181 = vmatprep.subr.mxu0 0.0
    %1182 = vmatpush1.msra.mxu0 0.0
    %1183 = vmatprep.subr.mxu0 0.0
    %1184 = vmatpush1.msra.mxu0 0.0
    %1185 = vmatprep.subr.mxu0 0.0
    %1186 = vmatpush1.msra.mxu0 0.0
    %1187 = vmatprep.subr.mxu0 0.0
    %1188 = vmatpush1.msra.mxu0 0.0
    %1189 = vmatprep.subr.mxu0 0.0
    %1190 = vmatpush1.msra.mxu0 0.0
    %1191 = vmatprep.subr.mxu0 0.0
    %1192 = vmatpush1.msra.mxu0 0.0
    %1193 = vmatprep.mubr.f32.mxu0 0.0
    %1194 = vmatmul.mubr.f32.gmra.mrb[0].mxu0 %v1124
    %v1195 = vpop.f32.mrb[0].mxu0
    %v1196 = vadd.f32 0.0, %v1195
    %v1197 = vpop.f32.mrb[0].mxu0
    %1198 = vmatprep.mubr.f32.mxu0 0.0
    %1199 = vmatmul.mubr.f32.gmra.mrb[0].mxu0 %v1127
    %v1200 = vpop.f32.mrb[0].mxu0
    %v1201 = vadd.f32 0.0, %v1200
    %v1202 = vpop.f32.mrb[0].mxu0
    %1203 = vdwg.mxu0
    %v1205 = vsel %vm88, %v953, 0
    %v1208 = vsel %vm88, %v958, 0
    %1210 = vmatprep.subr.mxu0 0.0
    %1211 = vmatpush1.msra.mxu0 %v953
    %1212 = vmatprep.subr.mxu0 0.0
    %1213 = vmatpush1.msra.mxu0 %v958
    %1214 = vmatprep.subr.mxu0 0.0
    %1215 = vmatpush1.msra.mxu0 0.0
    %1216 = vmatprep.subr.mxu0 0.0
    %1217 = vmatpush1.msra.mxu0 0.0
    %1218 = vmatprep.subr.mxu0 0.0
    %1219 = vmatpush1.msra.mxu0 0.0
    %1220 = vmatprep.subr.mxu0 0.0
    %1221 = vmatpush1.msra.mxu0 0.0
    %1222 = vmatprep.subr.mxu0 0.0
    %1223 = vmatpush1.msra.mxu0 0.0
    %1224 = vmatprep.subr.mxu0 0.0
    %1225 = vmatpush1.msra.mxu0 0.0
    %1226 = vmatprep.subr.mxu0 0.0
    %1227 = vmatpush1.msra.mxu0 0.0
    %1228 = vmatprep.subr.mxu0 0.0
    %1229 = vmatpush1.msra.mxu0 0.0
    %1230 = vmatprep.subr.mxu0 0.0
    %1231 = vmatpush1.msra.mxu0 0.0
    %1232 = vmatprep.subr.mxu0 0.0
    %1233 = vmatpush1.msra.mxu0 0.0
    %1234 = vmatprep.subr.mxu0 0.0
    %1235 = vmatpush1.msra.mxu0 0.0
    %1236 = vmatprep.subr.mxu0 0.0
    %1237 = vmatpush1.msra.mxu0 0.0
    %1238 = vmatprep.subr.mxu0 0.0
    %1239 = vmatpush1.msra.mxu0 0.0
    %1240 = vmatprep.subr.mxu0 0.0
    %1241 = vmatpush1.msra.mxu0 0.0
    %1242 = vmatprep.subr.mxu0 0.0
    %1243 = vmatpush1.msra.mxu0 0.0
    %1244 = vmatprep.subr.mxu0 0.0
    %1245 = vmatpush1.msra.mxu0 0.0
    %1246 = vmatprep.subr.mxu0 0.0
    %1247 = vmatpush1.msra.mxu0 0.0
    %1248 = vmatprep.subr.mxu0 0.0
    %1249 = vmatpush1.msra.mxu0 0.0
    %1250 = vmatprep.subr.mxu0 0.0
    %1251 = vmatpush1.msra.mxu0 0.0
    %1252 = vmatprep.subr.mxu0 0.0
    %1253 = vmatpush1.msra.mxu0 0.0
    %1254 = vmatprep.subr.mxu0 0.0
    %1255 = vmatpush1.msra.mxu0 0.0
    %1256 = vmatprep.subr.mxu0 0.0
    %1257 = vmatpush1.msra.mxu0 0.0
    %1258 = vmatprep.subr.mxu0 0.0
    %1259 = vmatpush1.msra.mxu0 0.0
    %1260 = vmatprep.subr.mxu0 0.0
    %1261 = vmatpush1.msra.mxu0 0.0
    %1262 = vmatprep.subr.mxu0 0.0
    %1263 = vmatpush1.msra.mxu0 0.0
    %1264 = vmatprep.subr.mxu0 0.0
    %1265 = vmatpush1.msra.mxu0 0.0
    %1266 = vmatprep.subr.mxu0 0.0
    %1267 = vmatpush1.msra.mxu0 0.0
    %1268 = vmatprep.subr.mxu0 0.0
    %1269 = vmatpush1.msra.mxu0 0.0
    %1270 = vmatprep.subr.mxu0 0.0
    %1271 = vmatpush1.msra.mxu0 0.0
    %1272 = vmatprep.subr.mxu0 0.0
    %1273 = vmatpush1.msra.mxu0 0.0
    %1274 = vmatprep.mubr.f32.mxu0 0.0
    %1275 = vmatmul.mubr.f32.gmra.mrb[0].mxu0 %v1205
    %v1276 = vpop.f32.mrb[0].mxu0
    %v1277 = vadd.f32 0.0, %v1276
    %v1278 = vpop.f32.mrb[0].mxu0
    %1279 = vmatprep.mubr.f32.mxu0 0.0
    %1280 = vmatmul.mubr.f32.gmra.mrb[0].mxu0 %v1208
    %v1281 = vpop.f32.mrb[0].mxu0
    %v1282 = vadd.f32 0.0, %v1281
    %v1283 = vpop.f32.mrb[0].mxu0
    %1284 = vdwg.mxu0
    %1285 = vst.msk [vmem:[#allocation7] sm:$0xff] %vm88, %v1034
    %1286 = vst.msk [vmem:[#allocation7 + $0x8] sm:$0xff] %vm88, %v1039
    %1287 = vst.msk [vmem:[#allocation7 + $0x10] sm:$0xff] %vm88, %v1115
    %1288 = vst.msk [vmem:[#allocation7 + $0x18] sm:$0xff] %vm88, %v1120
    %1289 = vst.msk [vmem:[#allocation7 + $0x20] sm:$0xff] %vm88, %v1196
    %1290 = vst.msk [vmem:[#allocation7 + $0x28] sm:$0xff] %vm88, %v1201
    %1291 = vst.msk [vmem:[#allocation7 + $0x30] sm:$0xff] %vm88, %v1277
    %1292 = vst.msk [vmem:[#allocation7 + $0x38] sm:$0xff] %vm88, %v1282
    // Predicated region
    $region18: #{tpu_custom_call.1} parent=1 // pred_check
      _
    $region19: #{tpu_custom_call.1} parent=1 // pred_check_branch
      %1294 = sbr.rel (0) target = $region21
    $region20: #{tpu_custom_call.1} parent=1 // pred_region
      %s1296 = ssub.s32 1024, 1024
      %1297 = vsyncadd [#allocation4], %s1296
      %s1298 = sshll.u32 [#allocation7], 4
      %s1299 = int_to_ptr.vmem [resolvable:$true] %s1298
      %1304 = dma.vmem_to_hbm [thread:$0]  %s1299, 1024, %s2, [#allocation4], 128, 128, 8
    $region21: #{tpu_custom_call.1} parent=1 // pred_fallthru
      _
    // Predicated region
    $region22: #{tpu_custom_call.1} parent=1 // pred_check
      _
    $region23: #{tpu_custom_call.1} parent=1 // pred_check_branch
      %1306 = sbr.rel (0) target = $region25
    $region24: #{tpu_custom_call.1} parent=1 // pred_region
      %1307 = dma.done [#allocation4], 1024
    $region25: #{tpu_custom_call.1} parent=1 // pred_fallthru
      _
    %1308 = vsyncpa [#allocation3], 1
    %1309 = vsyncpa [#allocation6], 1
    %1310 = vsyncpa [#allocation4], 1

</llo_original>
